<compile_context>
chip_gen: v7x
topology: tpu7x:2x2x1
jax: 0.10.0
libtpu: 0.0.40
codegen_flags: <defaults>
</compile_context>

<pallas_src>
import jax
import jax.numpy as jnp
from jax.experimental import pallas as pl
from jax.experimental.pallas import tpu as pltpu


def _round_up(x, m):
    return (x + m - 1) // m * m


def _self_attn_pool_kernel(mask_ref, h_ref, w_ref, o_ref):
    """One batch tile of SelfAttentionPooling.

    mask_ref : (TN, T)    f32           additive attention mask
    h_ref    : (TN, T, H) source dtype  batch_rep tile
    w_ref    : (1, H)     f32           Linear(H, 1).weight
    o_ref    : (TN, H)    source dtype  pooled utterance representations
    """
    hf = h_ref[...].astype(jnp.float32)          # (TN, T, H)
    wf = w_ref[...].astype(jnp.float32)[None]    # (1, 1, H)

    # att_logits = W(batch_rep).squeeze(-1): VPU multiply + lane-reduce over H.
    # (Linear bias dropped: constant over T, cancels exactly in the softmax.)
    logits = jnp.sum(hf * wf, axis=-1) + mask_ref[...]           # (TN, T)

    # numerically-stable softmax over T (lane axis), exact divide for parity.
    m = jnp.max(logits, axis=-1, keepdims=True)
    e = jnp.exp(logits - m)
    att = e / jnp.sum(e, axis=-1, keepdims=True)                 # (TN, T)

    # utter_rep = sum_T(batch_rep * att_w): VPU multiply + sublane-reduce over T.
    utter = jnp.sum(hf * att[:, :, None], axis=1)                # (TN, H)
    o_ref[...] = utter.astype(o_ref.dtype)


def _choose_tile_n(n, t, h, itemsize, block_budget_bytes):
    """Pick a sublane-aligned batch tile that yields multi-MiB input blocks."""
    row_bytes = max(t * h * itemsize, 1)
    tile = max(block_budget_bytes // row_bytes, 1)
    tile = max((tile // 8) * 8, 8)               # sublane-aligned batch tile
    n8 = _round_up(n, 8)
    tile = min(tile, n8)
    # Prefer >= 2 grid steps so the "parallel" batch axis can shard across the
    # two v7x TensorCores (and the pipeline has work to overlap).
    if tile >= n8 and n8 >= 16:
        tile = _round_up(pl.cdiv(n8, 2), 8)
    return tile


def self_attention_pooling(batch_rep, w, b=None, att_mask=None, *,
                           block_budget_bytes=4 * 1024 * 1024):
    """batch_rep: (N, T, H); w: (1, H) (torch Linear(H,1).weight); b: (1,).

    Returns (N, H), matching SelfAttentionPooling.forward (att_mask optional).
    The Linear bias is a per-row constant over the softmax axis, so it has no
    effect on the output; it is accepted for API parity and ignored.
    """
    del b  # cancels exactly in the softmax
    n, t, h = batch_rep.shape
    tile_n = _choose_tile_n(n, t, h, batch_rep.dtype.itemsize,
                            block_budget_bytes)

    if att_mask is None:
        mask = jnp.zeros((n, t), jnp.float32)
    else:
        mask = att_mask.astype(jnp.float32)
    wf = w.astype(jnp.float32)                                   # (1, H), tiny

    return pl.pallas_call(
        _self_attn_pool_kernel,
        out_shape=jax.ShapeDtypeStruct((n, h), batch_rep.dtype),
        grid_spec=pltpu.PrefetchScalarGridSpec(
            num_scalar_prefetch=0,
            grid=(pl.cdiv(n, tile_n),),
            in_specs=[
                pl.BlockSpec((tile_n, t), lambda i: (i, 0)),        # mask
                pl.BlockSpec((tile_n, t, h), lambda i: (i, 0, 0)),  # batch_rep
                pl.BlockSpec((1, h), lambda i: (0, 0)),             # W.weight
            ],
            out_specs=pl.BlockSpec((tile_n, h), lambda i: (i, 0)),
        ),
        compiler_params=pltpu.CompilerParams(
            dimension_semantics=("parallel",),
            vmem_limit_bytes=48 * 1024 * 1024,
        ),
    )(mask, batch_rep, wf)


def self_attention_pooling_ref(batch_rep, w, b, att_mask=None):
    """Plain-JAX reference mirroring the PyTorch module exactly."""
    logits = jnp.einsum('nth,oh->nto', batch_rep, w)[..., 0] + b[0]
    if att_mask is not None:
        logits = logits + att_mask
    att = jax.nn.softmax(logits, axis=-1)[..., None]
    return jnp.sum(batch_rep * att, axis=1)


if __name__ == "__main__":
    N, T, H = 16, 24, 80          # small shapes; H = SelfAttentionPooling input_dim

    key = jax.random.PRNGKey(0)
    kx, kw, kb = jax.random.split(key, 3)
    batch_rep = jax.random.normal(kx, (N, T, H), jnp.float32)
    w = jax.random.normal(kw, (1, H), jnp.float32) / jnp.sqrt(float(H))
    b = 0.1 * jax.random.normal(kb, (1,), jnp.float32)
    # additive mask as the reference expects: 0 for valid frames, -1e4 for padding
    lengths = T - (jnp.arange(N) % 5)
    att_mask = jnp.where(jnp.arange(T)[None, :] < lengths[:, None],
                         0.0, -1e4).astype(jnp.float32)

    out = jax.block_until_ready(
        jax.jit(self_attention_pooling)(batch_rep, w, b, att_mask))
    ref = self_attention_pooling_ref(batch_rep, w, b, att_mask)

    assert out.shape == (N, H), out.shape
    assert bool(jnp.all(jnp.isfinite(out)))
    err = float(jnp.max(jnp.abs(out - ref)))
    assert err < 1e-3, f"max abs err vs reference: {err}"
    print("KERNEL_OK")
</pallas_src>

<mosaic_0001>
module attributes {stable_mosaic.version = 11 : i64} {
  func.func @_self_attn_pool_kernel(%arg0: i32, %arg1: memref<8x24xf32, #tpu.memory_space<vmem>>, %arg2: memref<8x24x80xf32, #tpu.memory_space<vmem>>, %arg3: memref<1x80xf32, #tpu.memory_space<vmem>>, %arg4: memref<8x80xf32, #tpu.memory_space<vmem>>) attributes {dimension_semantics = [#tpu.dimension_semantics<parallel>], iteration_bounds = array<i64: 2>, scalar_prefetch = 0 : i64, scratch_operands = 0 : i64, tpu.core_type = #tpu.core_type<tc>, window_params = [{transform_indices = @transform_0, window_bounds = array<i64: 8, 24>}, {transform_indices = @transform_1, window_bounds = array<i64: 8, 24, 80>}, {pipeline_mode = #tpu.pipeline_mode<synchronous>, transform_indices = @transform_2, window_bounds = array<i64: 1, 80>}, {transform_indices = @transform_3, window_bounds = array<i64: 8, 80>}]} {
    %c0 = arith.constant 0 : index
    %c0_0 = arith.constant 0 : index
    %c0_1 = arith.constant 0 : index
    %0 = vector.load %arg2[%c0, %c0_0, %c0_1] : memref<8x24x80xf32, #tpu.memory_space<vmem>>, vector<8x24x80xf32>
    %c0_2 = arith.constant 0 : index
    %c0_3 = arith.constant 0 : index
    %1 = vector.load %arg3[%c0_2, %c0_3] : memref<1x80xf32, #tpu.memory_space<vmem>>, vector<1x80xf32>
    %2 = vector.shape_cast %1 : vector<1x80xf32> to vector<1x1x80xf32>
    %3 = vector.broadcast %2 : vector<1x1x80xf32> to vector<8x24x80xf32>
    %4 = arith.mulf %0, %3 : vector<8x24x80xf32>
    %cst = arith.constant dense<0.000000e+00> : vector<8x24xf32>
    %5 = vector.multi_reduction <add>, %4, %cst [2] : vector<8x24x80xf32> to vector<8x24xf32>
    %c0_4 = arith.constant 0 : index
    %c0_5 = arith.constant 0 : index
    %6 = vector.load %arg1[%c0_4, %c0_5] : memref<8x24xf32, #tpu.memory_space<vmem>>, vector<8x24xf32>
    %7 = arith.addf %5, %6 : vector<8x24xf32>
    %cst_6 = arith.constant dense<0xFF800000> : vector<8xf32>
    %8 = vector.multi_reduction <maximumf>, %7, %cst_6 [1] : vector<8x24xf32> to vector<8xf32>
    %9 = vector.shape_cast %8 : vector<8xf32> to vector<8x1xf32>
    %10 = vector.broadcast %9 : vector<8x1xf32> to vector<8x24xf32>
    %11 = arith.subf %7, %10 : vector<8x24xf32>
    %12 = math.exp %11 : vector<8x24xf32>
    %cst_7 = arith.constant dense<0.000000e+00> : vector<8xf32>
    %13 = vector.multi_reduction <add>, %12, %cst_7 [1] : vector<8x24xf32> to vector<8xf32>
    %14 = vector.shape_cast %13 : vector<8xf32> to vector<8x1xf32>
    %15 = vector.broadcast %14 : vector<8x1xf32> to vector<8x24xf32>
    %16 = arith.divf %12, %15 : vector<8x24xf32>
    %17 = vector.shape_cast %16 : vector<8x24xf32> to vector<8x24x1xf32>
    %18 = vector.broadcast %17 : vector<8x24x1xf32> to vector<8x24x80xf32>
    %19 = arith.mulf %0, %18 : vector<8x24x80xf32>
    %cst_8 = arith.constant dense<0.000000e+00> : vector<8x80xf32>
    %20 = vector.multi_reduction <add>, %19, %cst_8 [1] : vector<8x24x80xf32> to vector<8x80xf32>
    %c0_9 = arith.constant 0 : index
    %c0_10 = arith.constant 0 : index
    %21 = vector.load %arg4[%c0_9, %c0_10] : memref<8x80xf32, #tpu.memory_space<vmem>>, vector<8x80xf32>
    tpu.vector_store %arg4[%c0_9, %c0_10], %20 {strides = array<i32>} : memref<8x80xf32, #tpu.memory_space<vmem>>, vector<8x80xf32>,
    return
  }
  func.func @transform_0(%arg0: i32) -> (i32, i32) {
    %c0_i32 = arith.constant 0 : i32
    %c0_i32_0 = arith.constant 0 : i32
    return %arg0, %c0_i32 : i32, i32
  }
  func.func @transform_1(%arg0: i32) -> (i32, i32, i32) {
    %c0_i32 = arith.constant 0 : i32
    %c0_i32_0 = arith.constant 0 : i32
    %c0_i32_1 = arith.constant 0 : i32
    return %arg0, %c0_i32, %c0_i32_0 : i32, i32, i32
  }
  func.func @transform_2(%arg0: i32) -> (i32, i32) {
    %c0_i32 = arith.constant 0 : i32
    %c0_i32_0 = arith.constant 0 : i32
    %c0_i32_1 = arith.constant 0 : i32
    return %c0_i32, %c0_i32_0 : i32, i32
  }
  func.func @transform_3(%arg0: i32) -> (i32, i32) {
    %c0_i32 = arith.constant 0 : i32
    %c0_i32_0 = arith.constant 0 : i32
    return %arg0, %c0_i32 : i32, i32
  }
}

</mosaic_0001>

<llo_original>
// kernel: self_attention_pooling.1
$region0: #{self_attention_pooling.1}
  #allocation0 [shape = 'u32[]', space=smem, size = 0x4, offset = 0x4, fixed_abs, tag = 'smem constant byte address 0x4 - core index']
  #allocation1 [shape = 'u32[144,128]{1,0:T(1,128)}', space=vmem, size = 0x12000, scoped, tag = 'internal scratch']
  %s0 = inlined_call_operand.hbm [shape: f32[16,24], index: 0, kind: input, shape index: {}]
  %s1 = inlined_call_operand.hbm [shape: f32[16,24,80], index: 1, kind: input, shape index: {}]
  %s2 = inlined_call_operand.vmem [shape: f32[1,80], index: 2, kind: input, shape index: {}]
  %s3 = inlined_call_operand.hbm [shape: f32[16,80], index: 3, kind: output, shape index: {}]
  %s4 = sld [smem:[#allocation0]]
  $region53: #{self_attention_pooling.1} parent=0
    _
  %s6 = ssub.s32 1, %s4
  %s7 = scalar_select 0, %s6, %s4
  $region1: #{self_attention_pooling.1} parent=0
    #allocation2 [shape = 'u8[8192]{0}', space=vmem, size = 0x2000, scoped, tag = 'input window, operand 0']
    #allocation3 [shape = 's32[2]{0}', space=sflag, size = 0x8, scoped, tag = 'scoped memory for self_attention_pooling.1']
    #allocation4 [shape = 's32[2]{0}', space=sflag, size = 0x8, scoped, tag = 'scoped memory for self_attention_pooling.1']
    #allocation5 [shape = 'u8[196608]{0}', space=vmem, size = 0x30000, scoped, tag = 'input window, operand 1']
    #allocation6 [shape = 's32[2]{0}', space=sflag, size = 0x8, scoped, tag = 'scoped memory for self_attention_pooling.1']
    #allocation7 [shape = 'u8[8192]{0}', space=vmem, size = 0x2000, scoped, tag = 'output window, operand 0']
    %8 = vsyncpa [#allocation3], 0
    %s9 = scalar_lea.sflag [#allocation3], 1
    %10 = vsyncpa %s9, 0
    %11 = vsyncpa [#allocation6], 0
    %s12 = scalar_lea.sflag [#allocation6], 1
    %13 = vsyncpa %s12, 0
    %14 = vsyncpa [#allocation4], 0
    %s15 = scalar_lea.sflag [#allocation4], 1
    %16 = vsyncpa %s15, 0
    loop: start=0, step=1, limit=4
    $region2: #{self_attention_pooling.1} parent=1 // loop_pre_header
      _
    $region3: #{self_attention_pooling.1} parent=1 // loop_header
      %s18 = sphi 0, %s22
      %p19 = scmp.ge.s32.totalorder %s18, 4
      %s28 = sphi 0, %s30
      %s31 = sphi 0, %s28
      %s32 = sphi 0, %s31
      %s48 = sphi 0, %s32
      %s54 = sphi 0, %s56
      %s57 = sphi 0, %s54
      %s58 = sphi 0, %s57
      %s74 = sphi 0, %s58
      %s78 = sphi 0, %s78
      %s80 = sphi 0, %s78
      %s81 = sphi 0, %s80
      %s95 = sphi 0, %s81
      %s101 = sphi 0, %s103
      %s104 = sphi 0, %s101
      %s105 = sphi 0, %s104
      %s121 = sphi 0, %s105
    $region4: #{self_attention_pooling.1} parent=1 // loop_header_branch
      %21 = sbr.rel (%p19) target = $region8
    $region5: #{self_attention_pooling.1} parent=1 // loop_body
      %s23 = ssub.s32 %s18, 1
      %s24 = ssub.s32 %s18, 2
      %s25 = sadd.s32 %s18, 1
      %s26 = ssub.s32 %s18, %s25
      %p27 = scmp.eq.s32.totalorder %s26, 0
      %s29 = sadd.s32 %s28, 1
      %s30 = scalar_select %p27, %s28, %s29
      %p33 = pneg %p27
      %p34 = scmp.eq.s32.totalorder %s18, 1
      %p35 = por %p33, %p34
      %p36 = scmp.ne.s32.totalorder %s28, %s31
      %p37 = scmp.eq.s32.totalorder %s18, 0
      %p38 = por %p36, %p37
      %p39 = scmp.ne.s32.totalorder %s28, %s31
      %p40 = scmp.eq.s32.totalorder %s23, 1
      %p41 = por %p39, %p40
      %p42 = scmp.ne.s32.totalorder %s31, %s32
      %p43 = scmp.eq.s32.totalorder %s23, 0
      %p44 = por %p42, %p43
      %p45 = scmp.ne.s32.totalorder %s31, %s32
      %p46 = scmp.eq.s32.totalorder %s24, 1
      %p47 = por %p45, %p46
      %p49 = scmp.ne.s32.totalorder %s32, %s48
      %p50 = scmp.eq.s32.totalorder %s24, 0
      %p51 = por %p49, %p50
      %s52 = ssub.s32 %s18, %s25
      %p53 = scmp.eq.s32.totalorder %s52, 0
      %s55 = sadd.s32 %s54, 1
      %s56 = scalar_select %p53, %s54, %s55
      %p59 = pneg %p53
      %p60 = scmp.eq.s32.totalorder %s18, 1
      %p61 = por %p59, %p60
      %p62 = scmp.ne.s32.totalorder %s54, %s57
      %p63 = scmp.eq.s32.totalorder %s18, 0
      %p64 = por %p62, %p63
      %p65 = scmp.ne.s32.totalorder %s54, %s57
      %p66 = scmp.eq.s32.totalorder %s23, 1
      %p67 = por %p65, %p66
      %p68 = scmp.ne.s32.totalorder %s57, %s58
      %p69 = scmp.eq.s32.totalorder %s23, 0
      %p70 = por %p68, %p69
      %p71 = scmp.ne.s32.totalorder %s57, %s58
      %p72 = scmp.eq.s32.totalorder %s24, 1
      %p73 = por %p71, %p72
      %p75 = scmp.ne.s32.totalorder %s58, %s74
      %p76 = scmp.eq.s32.totalorder %s24, 0
      %p77 = por %p75, %p76
      %s79 = sadd.s32 %s78, 1
      %p82 = scmp.eq.s32.totalorder %s18, 1
      %p83 = scmp.ne.s32.totalorder %s78, %s80
      %p84 = scmp.eq.s32.totalorder %s18, 0
      %p85 = por %p83, %p84
      %p86 = scmp.ne.s32.totalorder %s78, %s80
      %p87 = scmp.eq.s32.totalorder %s23, 1
      %p88 = por %p86, %p87
      %p89 = scmp.ne.s32.totalorder %s80, %s81
      %p90 = scmp.eq.s32.totalorder %s23, 0
      %p91 = por %p89, %p90
      %p92 = scmp.ne.s32.totalorder %s80, %s81
      %p93 = scmp.eq.s32.totalorder %s24, 1
      %p94 = por %p92, %p93
      %p96 = scmp.ne.s32.totalorder %s81, %s95
      %p97 = scmp.eq.s32.totalorder %s24, 0
      %p98 = por %p96, %p97
      %s99 = ssub.s32 %s18, %s25
      %p100 = scmp.eq.s32.totalorder %s99, 0
      %s102 = sadd.s32 %s101, 1
      %s103 = scalar_select %p100, %s101, %s102
      %p106 = pneg %p100
      %p107 = scmp.eq.s32.totalorder %s18, 1
      %p108 = por %p106, %p107
      %p109 = scmp.ne.s32.totalorder %s101, %s104
      %p110 = scmp.eq.s32.totalorder %s18, 0
      %p111 = por %p109, %p110
      %p112 = scmp.ne.s32.totalorder %s101, %s104
      %p113 = scmp.eq.s32.totalorder %s23, 1
      %p114 = por %p112, %p113
      %p115 = scmp.ne.s32.totalorder %s104, %s105
      %p116 = scmp.eq.s32.totalorder %s23, 0
      %p117 = por %p115, %p116
      %p118 = scmp.ne.s32.totalorder %s104, %s105
      %p119 = scmp.eq.s32.totalorder %s24, 1
      %p120 = por %p118, %p119
      %p122 = scmp.ne.s32.totalorder %s105, %s121
      %p123 = scmp.eq.s32.totalorder %s24, 0
      %p124 = por %p122, %p123
      %p125 = scmp.le.s32.totalorder 1, %s18
      %p126 = scmp.lt.s32.totalorder %s18, 3
      %p127 = pnand %p125, %p126
      %p128 = pneg %p127
      // Predicated region
      $region9: #{self_attention_pooling.1} parent=5 // pred_check
        _
      $region10: #{self_attention_pooling.1} parent=5 // pred_check_branch
        %130 = sbr.rel (%p127) target = $region12
      $region11: #{self_attention_pooling.1} parent=5 // pred_region
        %s131 = ssub.s32 %s18, 1
        // Predicated region
        $region13: #{self_attention_pooling.1} parent=11 // pred_check
          %p132 = pneg %p91
        $region14: #{self_attention_pooling.1} parent=11 // pred_check_branch
          %134 = sbr.rel (%p132) target = $region16
        $region15: #{self_attention_pooling.1} parent=11 // pred_region
          _
        $region16: #{self_attention_pooling.1} parent=11 // pred_fallthru
          _
      $region12: #{self_attention_pooling.1} parent=5 // pred_fallthru
        _
      %p135 = scmp.lt.s32.totalorder %s18, 2
      // Predicated region
      $region17: #{self_attention_pooling.1} parent=5 // pred_check
        %p136 = pneg %p135
      $region18: #{self_attention_pooling.1} parent=5 // pred_check_branch
        %138 = sbr.rel (%p136) target = $region20
      $region19: #{self_attention_pooling.1} parent=5 // pred_region
        // Predicated region
        $region21: #{self_attention_pooling.1} parent=19 // pred_check
          %p139 = pneg %p38
        $region22: #{self_attention_pooling.1} parent=19 // pred_check_branch
          %141 = sbr.rel (%p139) target = $region24
        $region23: #{self_attention_pooling.1} parent=19 // pred_region
          %s142 = sand.u32 %s28, 1
          %s143 = scalar_lea.sflag [#allocation3], %s142
          %s144 = sand.u32 %s28, 1
          %s145 = smul.addr %s144, 8
          %s146 = scalar_lea.vmem [#allocation2], %s145
          %s148 = ssub.s32 128, 128
          %149 = vsyncadd %s143, %s148
          %s150 = smul.addr %s18, 128
          %s151 = scalar_lea.hbm %s0, %s150
          %s153 = sshll.u32 %s146, 4
          %s154 = int_to_ptr.vmem [resolvable:$true] %s153
          %156 = dma.hbm_to_vmem [thread:$0]  %s151, 128, %s154, %s143
        $region24: #{self_attention_pooling.1} parent=19 // pred_fallthru
          _
        // Predicated region
        $region25: #{self_attention_pooling.1} parent=19 // pred_check
          %p157 = pneg %p64
        $region26: #{self_attention_pooling.1} parent=19 // pred_check_branch
          %159 = sbr.rel (%p157) target = $region28
        $region27: #{self_attention_pooling.1} parent=19 // pred_region
          %s160 = sand.u32 %s54, 1
          %s161 = scalar_lea.sflag [#allocation6], %s160
          %s162 = sand.u32 %s54, 1
          %s163 = smul.addr %s162, 192
          %s164 = scalar_lea.vmem [#allocation5], %s163
          %s165 = smul.u32 8, %s18
          %s167 = ssub.s32 3072, 3072
          %168 = vsyncadd %s161, %s167
          %s169 = smul.addr %s165, 3
          %s170 = smul.addr %s169, 128
          %s171 = scalar_lea.hbm %s1, %s170
          %s172 = sshll.u32 %s164, 4
          %s173 = int_to_ptr.vmem [resolvable:$true] %s172
          %178 = dma.hbm_to_vmem [thread:$0]  %s171, 3072, %s173, %s161, 128, 128, 8
        $region28: #{self_attention_pooling.1} parent=19 // pred_fallthru
          _
      $region20: #{self_attention_pooling.1} parent=5 // pred_fallthru
        _
      %p179 = scmp.le.s32.totalorder 1, %s18
      %p180 = scmp.lt.s32.totalorder %s18, 3
      %p181 = pnand %p179, %p180
      %p182 = pneg %p181
      // Predicated region
      $region29: #{self_attention_pooling.1} parent=5 // pred_check
        _
      $region30: #{self_attention_pooling.1} parent=5 // pred_check_branch
        %184 = sbr.rel (%p181) target = $region32
      $region31: #{self_attention_pooling.1} parent=5 // pred_region
        %s185 = ssub.s32 %s18, 1
        %s186 = sand.u32 %s31, 1
        %s187 = scalar_lea.sflag [#allocation3], %s186
        %s188 = sand.u32 %s31, 1
        %s189 = smul.addr %s188, 8
        %s190 = scalar_lea.vmem [#allocation2], %s189
        // Predicated region
        $region33: #{self_attention_pooling.1} parent=31 // pred_check
          %p191 = pneg %p44
        $region34: #{self_attention_pooling.1} parent=31 // pred_check_branch
          %193 = sbr.rel (%p191) target = $region36
        $region35: #{self_attention_pooling.1} parent=31 // pred_region
          %194 = dma.done %s187, 128
        $region36: #{self_attention_pooling.1} parent=31 // pred_fallthru
          _
        %s195 = sand.u32 %s57, 1
        %s196 = scalar_lea.sflag [#allocation6], %s195
        %s197 = sand.u32 %s57, 1
        %s198 = smul.addr %s197, 192
        %s199 = scalar_lea.vmem [#allocation5], %s198
        // Predicated region
        $region37: #{self_attention_pooling.1} parent=31 // pred_check
          %p200 = pneg %p70
        $region38: #{self_attention_pooling.1} parent=31 // pred_check_branch
          %202 = sbr.rel (%p200) target = $region40
        $region39: #{self_attention_pooling.1} parent=31 // pred_region
          %203 = dma.done %s196, 3072
        $region40: #{self_attention_pooling.1} parent=31 // pred_fallthru
          _
        %s204 = sand.u32 %s31, 1
        %s205 = scalar_lea.sflag [#allocation3], %s204
        %s206 = sand.u32 %s31, 1
        %s207 = smul.addr %s206, 8
        %s208 = scalar_lea.vmem [#allocation2], %s207
        %p209 = pneg %p44
        %p210 = pneg %p41
        %s211 = sand.u32 %s57, 1
        %s212 = scalar_lea.sflag [#allocation6], %s211
        %s213 = sand.u32 %s57, 1
        %s214 = smul.addr %s213, 192
        %s215 = scalar_lea.vmem [#allocation5], %s214
        %p216 = pneg %p70
        %p217 = pneg %p67
        %p218 = pneg %p91
        %p219 = pneg %p88
        %p220 = pneg %p117
        %p221 = pneg %p114
        %s222 = sand.u32 %s104, 1
        %s223 = scalar_lea.sflag [#allocation4], %s222
        %s224 = sand.u32 %s104, 1
        %s225 = smul.addr %s224, 8
        %s226 = scalar_lea.vmem [#allocation7], %s225
        %s227 = smul.u32 8, %s23
        %v228 = vld [vmem:[%s199] sm:$0xff]
        %v229 = vld [vmem:[%s199 + $0x8] sm:$0xff]
        %v230 = vld [vmem:[%s199 + $0x10] sm:$0xff]
        %v231 = vld [vmem:[%s199 + $0x18] sm:$0xff]
        %v232 = vld [vmem:[%s199 + $0x20] sm:$0xff]
        %v233 = vld [vmem:[%s199 + $0x28] sm:$0xff]
        %v234 = vld [vmem:[%s199 + $0x30] sm:$0xff]
        %v235 = vld [vmem:[%s199 + $0x38] sm:$0xff]
        %v236 = vld [vmem:[%s199 + $0x40] sm:$0xff]
        %v237 = vld [vmem:[%s199 + $0x48] sm:$0xff]
        %v238 = vld [vmem:[%s199 + $0x50] sm:$0xff]
        %v239 = vld [vmem:[%s199 + $0x58] sm:$0xff]
        %v240 = vld [vmem:[%s199 + $0x60] sm:$0xff]
        %v241 = vld [vmem:[%s199 + $0x68] sm:$0xff]
        %v242 = vld [vmem:[%s199 + $0x70] sm:$0xff]
        %v243 = vld [vmem:[%s199 + $0x78] sm:$0xff]
        %v244 = vld [vmem:[%s199 + $0x80] sm:$0xff]
        %v245 = vld [vmem:[%s199 + $0x88] sm:$0xff]
        %v246 = vld [vmem:[%s199 + $0x90] sm:$0xff]
        %v247 = vld [vmem:[%s199 + $0x98] sm:$0xff]
        %v248 = vld [vmem:[%s199 + $0xa0] sm:$0xff]
        %v249 = vld [vmem:[%s199 + $0xa8] sm:$0xff]
        %v250 = vld [vmem:[%s199 + $0xb0] sm:$0xff]
        %v251 = vld [vmem:[%s199 + $0xb8] sm:$0xff]
        %v252 = vld [vmem:[%s2] sm:$0x1]
        %v254 = vlaneseq
        %v255 = vshrl.u32 %v254, 7
        %v256 = vsub.s32 0, %v255
        %v257 = vrot.slane %v252, %v256
        %v259 = vmul.f32 %v228, %v257
        %v260 = vmul.f32 %v229, %v257
        %v261 = vmul.f32 %v230, %v257
        %v262 = vmul.f32 %v231, %v257
        %v263 = vmul.f32 %v232, %v257
        %v264 = vmul.f32 %v233, %v257
        %v265 = vmul.f32 %v234, %v257
        %v266 = vmul.f32 %v235, %v257
        %v267 = vmul.f32 %v236, %v257
        %v268 = vmul.f32 %v237, %v257
        %v269 = vmul.f32 %v238, %v257
        %v270 = vmul.f32 %v239, %v257
        %v271 = vmul.f32 %v240, %v257
        %v272 = vmul.f32 %v241, %v257
        %v273 = vmul.f32 %v242, %v257
        %v274 = vmul.f32 %v243, %v257
        %v275 = vmul.f32 %v244, %v257
        %v276 = vmul.f32 %v245, %v257
        %v277 = vmul.f32 %v246, %v257
        %v278 = vmul.f32 %v247, %v257
        %v279 = vmul.f32 %v248, %v257
        %v280 = vmul.f32 %v249, %v257
        %v281 = vmul.f32 %v250, %v257
        %v282 = vmul.f32 %v251, %v257
        %vm283 = vcmask 654336
        %v284 = vsel %vm283, %v259, 0.0
        %285 = vadd.xlane.f32.xlu0 %v284
        %v286 = vpop.xlane.xlu0 %285
        %v287 = vsel %vm283, %v260, 0.0
        %288 = vadd.xlane.f32.xlu0 %v287
        %v289 = vpop.xlane.xlu0 %288
        %v290 = vsel %vm283, %v261, 0.0
        %291 = vadd.xlane.f32.xlu0 %v290
        %v292 = vpop.xlane.xlu0 %291
        %v293 = vsel %vm283, %v262, 0.0
        %294 = vadd.xlane.f32.xlu0 %v293
        %v295 = vpop.xlane.xlu0 %294
        %v296 = vsel %vm283, %v263, 0.0
        %297 = vadd.xlane.f32.xlu0 %v296
        %v298 = vpop.xlane.xlu0 %297
        %v299 = vsel %vm283, %v264, 0.0
        %300 = vadd.xlane.f32.xlu0 %v299
        %v301 = vpop.xlane.xlu0 %300
        %v302 = vsel %vm283, %v265, 0.0
        %303 = vadd.xlane.f32.xlu0 %v302
        %v304 = vpop.xlane.xlu0 %303
        %v305 = vsel %vm283, %v266, 0.0
        %306 = vadd.xlane.f32.xlu0 %v305
        %v307 = vpop.xlane.xlu0 %306
        %v308 = vsel %vm283, %v267, 0.0
        %309 = vadd.xlane.f32.xlu0 %v308
        %v310 = vpop.xlane.xlu0 %309
        %v311 = vsel %vm283, %v268, 0.0
        %312 = vadd.xlane.f32.xlu0 %v311
        %v313 = vpop.xlane.xlu0 %312
        %v314 = vsel %vm283, %v269, 0.0
        %315 = vadd.xlane.f32.xlu0 %v314
        %v316 = vpop.xlane.xlu0 %315
        %v317 = vsel %vm283, %v270, 0.0
        %318 = vadd.xlane.f32.xlu0 %v317
        %v319 = vpop.xlane.xlu0 %318
        %v320 = vsel %vm283, %v271, 0.0
        %321 = vadd.xlane.f32.xlu0 %v320
        %v322 = vpop.xlane.xlu0 %321
        %v323 = vsel %vm283, %v272, 0.0
        %324 = vadd.xlane.f32.xlu0 %v323
        %v325 = vpop.xlane.xlu0 %324
        %v326 = vsel %vm283, %v273, 0.0
        %327 = vadd.xlane.f32.xlu0 %v326
        %v328 = vpop.xlane.xlu0 %327
        %v329 = vsel %vm283, %v274, 0.0
        %330 = vadd.xlane.f32.xlu0 %v329
        %v331 = vpop.xlane.xlu0 %330
        %v332 = vsel %vm283, %v275, 0.0
        %333 = vadd.xlane.f32.xlu0 %v332
        %v334 = vpop.xlane.xlu0 %333
        %v335 = vsel %vm283, %v276, 0.0
        %336 = vadd.xlane.f32.xlu0 %v335
        %v337 = vpop.xlane.xlu0 %336
        %v338 = vsel %vm283, %v277, 0.0
        %339 = vadd.xlane.f32.xlu0 %v338
        %v340 = vpop.xlane.xlu0 %339
        %v341 = vsel %vm283, %v278, 0.0
        %342 = vadd.xlane.f32.xlu0 %v341
        %v343 = vpop.xlane.xlu0 %342
        %v344 = vsel %vm283, %v279, 0.0
        %345 = vadd.xlane.f32.xlu0 %v344
        %v346 = vpop.xlane.xlu0 %345
        %v347 = vsel %vm283, %v280, 0.0
        %348 = vadd.xlane.f32.xlu0 %v347
        %v349 = vpop.xlane.xlu0 %348
        %v350 = vsel %vm283, %v281, 0.0
        %351 = vadd.xlane.f32.xlu0 %v350
        %v352 = vpop.xlane.xlu0 %351
        %v353 = vsel %vm283, %v282, 0.0
        %354 = vadd.xlane.f32.xlu0 %v353
        %v355 = vpop.xlane.xlu0 %354
        %v356 = vld [vmem:[%s190] sm:$0xff]
        %v358 = vlaneseq
        %v359 = vshrl.u32 %v358, 7
        %v360 = vsub.s32 0, %v359
        %v361 = vrot.slane %v356, %v360
        %363 = vbcast.lane.b32.xlu0 %v361, 256
        %v364 = vpop.permute.xlu0 %363
        %s366 = sor.u32 256, 8
        %367 = vbcast.lane.b32.xlu0 %v361, %s366
        %v368 = vpop.permute.xlu0 %367
        %s370 = sor.u32 256, 16
        %371 = vbcast.lane.b32.xlu0 %v361, %s370
        %v372 = vpop.permute.xlu0 %371
        %v373 = vlaneseq
        %v374 = vshrl.u32 %v373, 7
        %v375 = vsub.s32 1, %v374
        %v376 = vrot.slane %v356, %v375
        %378 = vbcast.lane.b32.xlu0 %v376, 256
        %v379 = vpop.permute.xlu0 %378
        %s381 = sor.u32 256, 8
        %382 = vbcast.lane.b32.xlu0 %v376, %s381
        %v383 = vpop.permute.xlu0 %382
        %s385 = sor.u32 256, 16
        %386 = vbcast.lane.b32.xlu0 %v376, %s385
        %v387 = vpop.permute.xlu0 %386
        %v388 = vlaneseq
        %v389 = vshrl.u32 %v388, 7
        %v390 = vsub.s32 2, %v389
        %v391 = vrot.slane %v356, %v390
        %393 = vbcast.lane.b32.xlu0 %v391, 256
        %v394 = vpop.permute.xlu0 %393
        %s396 = sor.u32 256, 8
        %397 = vbcast.lane.b32.xlu0 %v391, %s396
        %v398 = vpop.permute.xlu0 %397
        %s400 = sor.u32 256, 16
        %401 = vbcast.lane.b32.xlu0 %v391, %s400
        %v402 = vpop.permute.xlu0 %401
        %v403 = vlaneseq
        %v404 = vshrl.u32 %v403, 7
        %v405 = vsub.s32 3, %v404
        %v406 = vrot.slane %v356, %v405
        %408 = vbcast.lane.b32.xlu0 %v406, 256
        %v409 = vpop.permute.xlu0 %408
        %s411 = sor.u32 256, 8
        %412 = vbcast.lane.b32.xlu0 %v406, %s411
        %v413 = vpop.permute.xlu0 %412
        %s415 = sor.u32 256, 16
        %416 = vbcast.lane.b32.xlu0 %v406, %s415
        %v417 = vpop.permute.xlu0 %416
        %v418 = vlaneseq
        %v419 = vshrl.u32 %v418, 7
        %v420 = vsub.s32 4, %v419
        %v421 = vrot.slane %v356, %v420
        %423 = vbcast.lane.b32.xlu0 %v421, 256
        %v424 = vpop.permute.xlu0 %423
        %s426 = sor.u32 256, 8
        %427 = vbcast.lane.b32.xlu0 %v421, %s426
        %v428 = vpop.permute.xlu0 %427
        %s430 = sor.u32 256, 16
        %431 = vbcast.lane.b32.xlu0 %v421, %s430
        %v432 = vpop.permute.xlu0 %431
        %v433 = vlaneseq
        %v434 = vshrl.u32 %v433, 7
        %v435 = vsub.s32 5, %v434
        %v436 = vrot.slane %v356, %v435
        %438 = vbcast.lane.b32.xlu0 %v436, 256
        %v439 = vpop.permute.xlu0 %438
        %s441 = sor.u32 256, 8
        %442 = vbcast.lane.b32.xlu0 %v436, %s441
        %v443 = vpop.permute.xlu0 %442
        %s445 = sor.u32 256, 16
        %446 = vbcast.lane.b32.xlu0 %v436, %s445
        %v447 = vpop.permute.xlu0 %446
        %v448 = vlaneseq
        %v449 = vshrl.u32 %v448, 7
        %v450 = vsub.s32 6, %v449
        %v451 = vrot.slane %v356, %v450
        %453 = vbcast.lane.b32.xlu0 %v451, 256
        %v454 = vpop.permute.xlu0 %453
        %s456 = sor.u32 256, 8
        %457 = vbcast.lane.b32.xlu0 %v451, %s456
        %v458 = vpop.permute.xlu0 %457
        %s460 = sor.u32 256, 16
        %461 = vbcast.lane.b32.xlu0 %v451, %s460
        %v462 = vpop.permute.xlu0 %461
        %v463 = vlaneseq
        %v464 = vshrl.u32 %v463, 7
        %v465 = vsub.s32 7, %v464
        %v466 = vrot.slane %v356, %v465
        %468 = vbcast.lane.b32.xlu0 %v466, 256
        %v469 = vpop.permute.xlu0 %468
        %s471 = sor.u32 256, 8
        %472 = vbcast.lane.b32.xlu0 %v466, %s471
        %v473 = vpop.permute.xlu0 %472
        %s475 = sor.u32 256, 16
        %476 = vbcast.lane.b32.xlu0 %v466, %s475
        %v477 = vpop.permute.xlu0 %476
        %v502 = vadd.f32 %v286, %v364
        %v503 = vadd.f32 %v289, %v368
        %v504 = vadd.f32 %v292, %v372
        %v505 = vadd.f32 %v295, %v379
        %v506 = vadd.f32 %v298, %v383
        %v507 = vadd.f32 %v301, %v387
        %v508 = vadd.f32 %v304, %v394
        %v509 = vadd.f32 %v307, %v398
        %v510 = vadd.f32 %v310, %v402
        %v511 = vadd.f32 %v313, %v409
        %v512 = vadd.f32 %v316, %v413
        %v513 = vadd.f32 %v319, %v417
        %v514 = vadd.f32 %v322, %v424
        %v515 = vadd.f32 %v325, %v428
        %v516 = vadd.f32 %v328, %v432
        %v517 = vadd.f32 %v331, %v439
        %v518 = vadd.f32 %v334, %v443
        %v519 = vadd.f32 %v337, %v447
        %v520 = vadd.f32 %v340, %v454
        %v521 = vadd.f32 %v343, %v458
        %v522 = vadd.f32 %v346, %v462
        %v523 = vadd.f32 %v349, %v469
        %v524 = vadd.f32 %v352, %v473
        %v525 = vadd.f32 %v355, %v477
        %550 = vset.pattern.permute.xlu0 0
        %551 = vperm.xlu0 %550, %v502
        %v552 = vpop.permute.xlu0 %551
        %553 = vset.pattern.permute.xlu0 0
        %554 = vperm.xlu0 %553, %v503
        %v555 = vpop.permute.xlu0 %554
        %556 = vset.pattern.permute.xlu0 0
        %557 = vperm.xlu0 %556, %v504
        %v558 = vpop.permute.xlu0 %557
        %559 = vset.pattern.permute.xlu0 0
        %560 = vperm.xlu0 %559, %v505
        %v561 = vpop.permute.xlu0 %560
        %562 = vset.pattern.permute.xlu0 0
        %563 = vperm.xlu0 %562, %v506
        %v564 = vpop.permute.xlu0 %563
        %565 = vset.pattern.permute.xlu0 0
        %566 = vperm.xlu0 %565, %v507
        %v567 = vpop.permute.xlu0 %566
        %568 = vset.pattern.permute.xlu0 0
        %569 = vperm.xlu0 %568, %v508
        %v570 = vpop.permute.xlu0 %569
        %571 = vset.pattern.permute.xlu0 0
        %572 = vperm.xlu0 %571, %v509
        %v573 = vpop.permute.xlu0 %572
        %574 = vset.pattern.permute.xlu0 0
        %575 = vperm.xlu0 %574, %v510
        %v576 = vpop.permute.xlu0 %575
        %577 = vset.pattern.permute.xlu0 0
        %578 = vperm.xlu0 %577, %v511
        %v579 = vpop.permute.xlu0 %578
        %580 = vset.pattern.permute.xlu0 0
        %581 = vperm.xlu0 %580, %v512
        %v582 = vpop.permute.xlu0 %581
        %583 = vset.pattern.permute.xlu0 0
        %584 = vperm.xlu0 %583, %v513
        %v585 = vpop.permute.xlu0 %584
        %586 = vset.pattern.permute.xlu0 0
        %587 = vperm.xlu0 %586, %v514
        %v588 = vpop.permute.xlu0 %587
        %589 = vset.pattern.permute.xlu0 0
        %590 = vperm.xlu0 %589, %v515
        %v591 = vpop.permute.xlu0 %590
        %592 = vset.pattern.permute.xlu0 0
        %593 = vperm.xlu0 %592, %v516
        %v594 = vpop.permute.xlu0 %593
        %595 = vset.pattern.permute.xlu0 0
        %596 = vperm.xlu0 %595, %v517
        %v597 = vpop.permute.xlu0 %596
        %598 = vset.pattern.permute.xlu0 0
        %599 = vperm.xlu0 %598, %v518
        %v600 = vpop.permute.xlu0 %599
        %601 = vset.pattern.permute.xlu0 0
        %602 = vperm.xlu0 %601, %v519
        %v603 = vpop.permute.xlu0 %602
        %604 = vset.pattern.permute.xlu0 0
        %605 = vperm.xlu0 %604, %v520
        %v606 = vpop.permute.xlu0 %605
        %607 = vset.pattern.permute.xlu0 0
        %608 = vperm.xlu0 %607, %v521
        %v609 = vpop.permute.xlu0 %608
        %610 = vset.pattern.permute.xlu0 0
        %611 = vperm.xlu0 %610, %v522
        %v612 = vpop.permute.xlu0 %611
        %613 = vset.pattern.permute.xlu0 0
        %614 = vperm.xlu0 %613, %v523
        %v615 = vpop.permute.xlu0 %614
        %616 = vset.pattern.permute.xlu0 0
        %617 = vperm.xlu0 %616, %v524
        %v618 = vpop.permute.xlu0 %617
        %619 = vset.pattern.permute.xlu0 0
        %620 = vperm.xlu0 %619, %v525
        %v621 = vpop.permute.xlu0 %620
        %v622 = vlaneseq
        %v623 = vand.u32 %v622, 127
        %v624 = vlaneseq
        %v625 = vshrl.u32 %v624, 7
        %v626 = vsub.s32 %v623, %v625
        %v627 = vrot.slane %v552, %v626
        %v628 = vadd.s32 %v623, 4294967288
        %v629 = vlaneseq
        %v630 = vshrl.u32 %v629, 7
        %v631 = vsub.s32 %v628, %v630
        %v632 = vrot.slane %v555, %v631
        %vm633 = vcmask 130112
        %v634 = vsel %vm633, %v632, %v627
        %v635 = vadd.s32 %v623, 4294967280
        %v636 = vlaneseq
        %v637 = vshrl.u32 %v636, 7
        %v638 = vsub.s32 %v635, %v637
        %v639 = vrot.slane %v558, %v638
        %vm640 = vcmask 195712
        %v641 = vsel %vm640, %v639, %v634
        %v642 = vlaneseq
        %v643 = vshrl.u32 %v642, 7
        %v644 = vsub.s32 %v623, %v643
        %v645 = vrot.slane %v561, %v644
        %v646 = vlaneseq
        %v647 = vshrl.u32 %v646, 7
        %v648 = vsub.s32 %v628, %v647
        %v649 = vrot.slane %v564, %v648
        %v650 = vsel %vm633, %v649, %v645
        %v651 = vlaneseq
        %v652 = vshrl.u32 %v651, 7
        %v653 = vsub.s32 %v635, %v652
        %v654 = vrot.slane %v567, %v653
        %v655 = vsel %vm640, %v654, %v650
        %v656 = vlaneseq
        %v657 = vshrl.u32 %v656, 7
        %v658 = vsub.s32 %v623, %v657
        %v659 = vrot.slane %v570, %v658
        %v660 = vlaneseq
        %v661 = vshrl.u32 %v660, 7
        %v662 = vsub.s32 %v628, %v661
        %v663 = vrot.slane %v573, %v662
        %v664 = vsel %vm633, %v663, %v659
        %v665 = vlaneseq
        %v666 = vshrl.u32 %v665, 7
        %v667 = vsub.s32 %v635, %v666
        %v668 = vrot.slane %v576, %v667
        %v669 = vsel %vm640, %v668, %v664
        %v670 = vlaneseq
        %v671 = vshrl.u32 %v670, 7
        %v672 = vsub.s32 %v623, %v671
        %v673 = vrot.slane %v579, %v672
        %v674 = vlaneseq
        %v675 = vshrl.u32 %v674, 7
        %v676 = vsub.s32 %v628, %v675
        %v677 = vrot.slane %v582, %v676
        %v678 = vsel %vm633, %v677, %v673
        %v679 = vlaneseq
        %v680 = vshrl.u32 %v679, 7
        %v681 = vsub.s32 %v635, %v680
        %v682 = vrot.slane %v585, %v681
        %v683 = vsel %vm640, %v682, %v678
        %v684 = vlaneseq
        %v685 = vshrl.u32 %v684, 7
        %v686 = vsub.s32 %v623, %v685
        %v687 = vrot.slane %v588, %v686
        %v688 = vlaneseq
        %v689 = vshrl.u32 %v688, 7
        %v690 = vsub.s32 %v628, %v689
        %v691 = vrot.slane %v591, %v690
        %v692 = vsel %vm633, %v691, %v687
        %v693 = vlaneseq
        %v694 = vshrl.u32 %v693, 7
        %v695 = vsub.s32 %v635, %v694
        %v696 = vrot.slane %v594, %v695
        %v697 = vsel %vm640, %v696, %v692
        %v698 = vlaneseq
        %v699 = vshrl.u32 %v698, 7
        %v700 = vsub.s32 %v623, %v699
        %v701 = vrot.slane %v597, %v700
        %v702 = vlaneseq
        %v703 = vshrl.u32 %v702, 7
        %v704 = vsub.s32 %v628, %v703
        %v705 = vrot.slane %v600, %v704
        %v706 = vsel %vm633, %v705, %v701
        %v707 = vlaneseq
        %v708 = vshrl.u32 %v707, 7
        %v709 = vsub.s32 %v635, %v708
        %v710 = vrot.slane %v603, %v709
        %v711 = vsel %vm640, %v710, %v706
        %v712 = vlaneseq
        %v713 = vshrl.u32 %v712, 7
        %v714 = vsub.s32 %v623, %v713
        %v715 = vrot.slane %v606, %v714
        %v716 = vlaneseq
        %v717 = vshrl.u32 %v716, 7
        %v718 = vsub.s32 %v628, %v717
        %v719 = vrot.slane %v609, %v718
        %v720 = vsel %vm633, %v719, %v715
        %v721 = vlaneseq
        %v722 = vshrl.u32 %v721, 7
        %v723 = vsub.s32 %v635, %v722
        %v724 = vrot.slane %v612, %v723
        %v725 = vsel %vm640, %v724, %v720
        %v726 = vlaneseq
        %v727 = vshrl.u32 %v726, 7
        %v728 = vsub.s32 %v623, %v727
        %v729 = vrot.slane %v615, %v728
        %v730 = vlaneseq
        %v731 = vshrl.u32 %v730, 7
        %v732 = vsub.s32 %v628, %v731
        %v733 = vrot.slane %v618, %v732
        %v734 = vsel %vm633, %v733, %v729
        %v735 = vlaneseq
        %v736 = vshrl.u32 %v735, 7
        %v737 = vsub.s32 %v635, %v736
        %v738 = vrot.slane %v621, %v737
        %v739 = vsel %vm640, %v738, %v734
        %vm740 = vcmask 1041409
        %v741 = vsel %vm740, %v655, %v641
        %vm742 = vcmask 1042434
        %v743 = vsel %vm742, %v669, %v741
        %vm744 = vcmask 1043459
        %v745 = vsel %vm744, %v683, %v743
        %vm746 = vcmask 1044484
        %v747 = vsel %vm746, %v697, %v745
        %vm748 = vcmask 1045509
        %v749 = vsel %vm748, %v711, %v747
        %vm750 = vcmask 1046534
        %v751 = vsel %vm750, %v725, %v749
        %vm752 = vcmask 1047559
        %v753 = vsel %vm752, %v739, %v751
        %vm755 = vcmask 195584
        %v756 = vsel %vm755, %v753, -inf
        %757 = vmax.xlane.f32.xlu0 %v756
        %v758 = vpop.xlane.xlu0 %757
        %v760 = vlaneseq
        %v761 = vshrl.u32 %v760, 7
        %v762 = vsub.s32 0, %v761
        %v763 = vrot.slane %v758, %v762
        %v764 = vlaneseq
        %v765 = vshrl.u32 %v764, 7
        %v766 = vsub.s32 1, %v765
        %v767 = vrot.slane %v758, %v766
        %v768 = vlaneseq
        %v769 = vshrl.u32 %v768, 7
        %v770 = vsub.s32 2, %v769
        %v771 = vrot.slane %v758, %v770
        %v772 = vlaneseq
        %v773 = vshrl.u32 %v772, 7
        %v774 = vsub.s32 3, %v773
        %v775 = vrot.slane %v758, %v774
        %v776 = vlaneseq
        %v777 = vshrl.u32 %v776, 7
        %v778 = vsub.s32 4, %v777
        %v779 = vrot.slane %v758, %v778
        %v780 = vlaneseq
        %v781 = vshrl.u32 %v780, 7
        %v782 = vsub.s32 5, %v781
        %v783 = vrot.slane %v758, %v782
        %v784 = vlaneseq
        %v785 = vshrl.u32 %v784, 7
        %v786 = vsub.s32 6, %v785
        %v787 = vrot.slane %v758, %v786
        %v788 = vlaneseq
        %v789 = vshrl.u32 %v788, 7
        %v790 = vsub.s32 7, %v789
        %v791 = vrot.slane %v758, %v790
        %v800 = vsub.f32 %v502, %v763
        %v801 = vsub.f32 %v503, %v763
        %v802 = vsub.f32 %v504, %v763
        %v803 = vsub.f32 %v505, %v767
        %v804 = vsub.f32 %v506, %v767
        %v805 = vsub.f32 %v507, %v767
        %v806 = vsub.f32 %v508, %v771
        %v807 = vsub.f32 %v509, %v771
        %v808 = vsub.f32 %v510, %v771
        %v809 = vsub.f32 %v511, %v775
        %v810 = vsub.f32 %v512, %v775
        %v811 = vsub.f32 %v513, %v775
        %v812 = vsub.f32 %v514, %v779
        %v813 = vsub.f32 %v515, %v779
        %v814 = vsub.f32 %v516, %v779
        %v815 = vsub.f32 %v517, %v783
        %v816 = vsub.f32 %v518, %v783
        %v817 = vsub.f32 %v519, %v783
        %v818 = vsub.f32 %v520, %v787
        %v819 = vsub.f32 %v521, %v787
        %v820 = vsub.f32 %v522, %v787
        %v821 = vsub.f32 %v523, %v791
        %v822 = vsub.f32 %v524, %v791
        %v823 = vsub.f32 %v525, %v791
        %v824 = vmul.f32 %v800, 1.442695
        %v825 = vpow.pop %v824
        %v826 = vmul.f32 %v801, 1.442695
        %v827 = vpow.pop %v826
        %v828 = vmul.f32 %v802, 1.442695
        %v829 = vpow.pop %v828
        %v830 = vmul.f32 %v803, 1.442695
        %v831 = vpow.pop %v830
        %v832 = vmul.f32 %v804, 1.442695
        %v833 = vpow.pop %v832
        %v834 = vmul.f32 %v805, 1.442695
        %v835 = vpow.pop %v834
        %v836 = vmul.f32 %v806, 1.442695
        %v837 = vpow.pop %v836
        %v838 = vmul.f32 %v807, 1.442695
        %v839 = vpow.pop %v838
        %v840 = vmul.f32 %v808, 1.442695
        %v841 = vpow.pop %v840
        %v842 = vmul.f32 %v809, 1.442695
        %v843 = vpow.pop %v842
        %v844 = vmul.f32 %v810, 1.442695
        %v845 = vpow.pop %v844
        %v846 = vmul.f32 %v811, 1.442695
        %v847 = vpow.pop %v846
        %v848 = vmul.f32 %v812, 1.442695
        %v849 = vpow.pop %v848
        %v850 = vmul.f32 %v813, 1.442695
        %v851 = vpow.pop %v850
        %v852 = vmul.f32 %v814, 1.442695
        %v853 = vpow.pop %v852
        %v854 = vmul.f32 %v815, 1.442695
        %v855 = vpow.pop %v854
        %v856 = vmul.f32 %v816, 1.442695
        %v857 = vpow.pop %v856
        %v858 = vmul.f32 %v817, 1.442695
        %v859 = vpow.pop %v858
        %v860 = vmul.f32 %v818, 1.442695
        %v861 = vpow.pop %v860
        %v862 = vmul.f32 %v819, 1.442695
        %v863 = vpow.pop %v862
        %v864 = vmul.f32 %v820, 1.442695
        %v865 = vpow.pop %v864
        %v866 = vmul.f32 %v821, 1.442695
        %v867 = vpow.pop %v866
        %v868 = vmul.f32 %v822, 1.442695
        %v869 = vpow.pop %v868
        %v870 = vmul.f32 %v823, 1.442695
        %v871 = vpow.pop %v870
        %896 = vset.pattern.permute.xlu0 0
        %897 = vperm.xlu0 %896, %v825
        %v898 = vpop.permute.xlu0 %897
        %899 = vset.pattern.permute.xlu0 0
        %900 = vperm.xlu0 %899, %v827
        %v901 = vpop.permute.xlu0 %900
        %902 = vset.pattern.permute.xlu0 0
        %903 = vperm.xlu0 %902, %v829
        %v904 = vpop.permute.xlu0 %903
        %905 = vset.pattern.permute.xlu0 0
        %906 = vperm.xlu0 %905, %v831
        %v907 = vpop.permute.xlu0 %906
        %908 = vset.pattern.permute.xlu0 0
        %909 = vperm.xlu0 %908, %v833
        %v910 = vpop.permute.xlu0 %909
        %911 = vset.pattern.permute.xlu0 0
        %912 = vperm.xlu0 %911, %v835
        %v913 = vpop.permute.xlu0 %912
        %914 = vset.pattern.permute.xlu0 0
        %915 = vperm.xlu0 %914, %v837
        %v916 = vpop.permute.xlu0 %915
        %917 = vset.pattern.permute.xlu0 0
        %918 = vperm.xlu0 %917, %v839
        %v919 = vpop.permute.xlu0 %918
        %920 = vset.pattern.permute.xlu0 0
        %921 = vperm.xlu0 %920, %v841
        %v922 = vpop.permute.xlu0 %921
        %923 = vset.pattern.permute.xlu0 0
        %924 = vperm.xlu0 %923, %v843
        %v925 = vpop.permute.xlu0 %924
        %926 = vset.pattern.permute.xlu0 0
        %927 = vperm.xlu0 %926, %v845
        %v928 = vpop.permute.xlu0 %927
        %929 = vset.pattern.permute.xlu0 0
        %930 = vperm.xlu0 %929, %v847
        %v931 = vpop.permute.xlu0 %930
        %932 = vset.pattern.permute.xlu0 0
        %933 = vperm.xlu0 %932, %v849
        %v934 = vpop.permute.xlu0 %933
        %935 = vset.pattern.permute.xlu0 0
        %936 = vperm.xlu0 %935, %v851
        %v937 = vpop.permute.xlu0 %936
        %938 = vset.pattern.permute.xlu0 0
        %939 = vperm.xlu0 %938, %v853
        %v940 = vpop.permute.xlu0 %939
        %941 = vset.pattern.permute.xlu0 0
        %942 = vperm.xlu0 %941, %v855
        %v943 = vpop.permute.xlu0 %942
        %944 = vset.pattern.permute.xlu0 0
        %945 = vperm.xlu0 %944, %v857
        %v946 = vpop.permute.xlu0 %945
        %947 = vset.pattern.permute.xlu0 0
        %948 = vperm.xlu0 %947, %v859
        %v949 = vpop.permute.xlu0 %948
        %950 = vset.pattern.permute.xlu0 0
        %951 = vperm.xlu0 %950, %v861
        %v952 = vpop.permute.xlu0 %951
        %953 = vset.pattern.permute.xlu0 0
        %954 = vperm.xlu0 %953, %v863
        %v955 = vpop.permute.xlu0 %954
        %956 = vset.pattern.permute.xlu0 0
        %957 = vperm.xlu0 %956, %v865
        %v958 = vpop.permute.xlu0 %957
        %959 = vset.pattern.permute.xlu0 0
        %960 = vperm.xlu0 %959, %v867
        %v961 = vpop.permute.xlu0 %960
        %962 = vset.pattern.permute.xlu0 0
        %963 = vperm.xlu0 %962, %v869
        %v964 = vpop.permute.xlu0 %963
        %965 = vset.pattern.permute.xlu0 0
        %966 = vperm.xlu0 %965, %v871
        %v967 = vpop.permute.xlu0 %966
        %v968 = vlaneseq
        %v969 = vshrl.u32 %v968, 7
        %v970 = vsub.s32 %v623, %v969
        %v971 = vrot.slane %v898, %v970
        %v972 = vlaneseq
        %v973 = vshrl.u32 %v972, 7
        %v974 = vsub.s32 %v628, %v973
        %v975 = vrot.slane %v901, %v974
        %v976 = vsel %vm633, %v975, %v971
        %v977 = vlaneseq
        %v978 = vshrl.u32 %v977, 7
        %v979 = vsub.s32 %v635, %v978
        %v980 = vrot.slane %v904, %v979
        %v981 = vsel %vm640, %v980, %v976
        %v982 = vlaneseq
        %v983 = vshrl.u32 %v982, 7
        %v984 = vsub.s32 %v623, %v983
        %v985 = vrot.slane %v907, %v984
        %v986 = vlaneseq
        %v987 = vshrl.u32 %v986, 7
        %v988 = vsub.s32 %v628, %v987
        %v989 = vrot.slane %v910, %v988
        %v990 = vsel %vm633, %v989, %v985
        %v991 = vlaneseq
        %v992 = vshrl.u32 %v991, 7
        %v993 = vsub.s32 %v635, %v992
        %v994 = vrot.slane %v913, %v993
        %v995 = vsel %vm640, %v994, %v990
        %v996 = vlaneseq
        %v997 = vshrl.u32 %v996, 7
        %v998 = vsub.s32 %v623, %v997
        %v999 = vrot.slane %v916, %v998
        %v1000 = vlaneseq
        %v1001 = vshrl.u32 %v1000, 7
        %v1002 = vsub.s32 %v628, %v1001
        %v1003 = vrot.slane %v919, %v1002
        %v1004 = vsel %vm633, %v1003, %v999
        %v1005 = vlaneseq
        %v1006 = vshrl.u32 %v1005, 7
        %v1007 = vsub.s32 %v635, %v1006
        %v1008 = vrot.slane %v922, %v1007
        %v1009 = vsel %vm640, %v1008, %v1004
        %v1010 = vlaneseq
        %v1011 = vshrl.u32 %v1010, 7
        %v1012 = vsub.s32 %v623, %v1011
        %v1013 = vrot.slane %v925, %v1012
        %v1014 = vlaneseq
        %v1015 = vshrl.u32 %v1014, 7
        %v1016 = vsub.s32 %v628, %v1015
        %v1017 = vrot.slane %v928, %v1016
        %v1018 = vsel %vm633, %v1017, %v1013
        %v1019 = vlaneseq
        %v1020 = vshrl.u32 %v1019, 7
        %v1021 = vsub.s32 %v635, %v1020
        %v1022 = vrot.slane %v931, %v1021
        %v1023 = vsel %vm640, %v1022, %v1018
        %v1024 = vlaneseq
        %v1025 = vshrl.u32 %v1024, 7
        %v1026 = vsub.s32 %v623, %v1025
        %v1027 = vrot.slane %v934, %v1026
        %v1028 = vlaneseq
        %v1029 = vshrl.u32 %v1028, 7
        %v1030 = vsub.s32 %v628, %v1029
        %v1031 = vrot.slane %v937, %v1030
        %v1032 = vsel %vm633, %v1031, %v1027
        %v1033 = vlaneseq
        %v1034 = vshrl.u32 %v1033, 7
        %v1035 = vsub.s32 %v635, %v1034
        %v1036 = vrot.slane %v940, %v1035
        %v1037 = vsel %vm640, %v1036, %v1032
        %v1038 = vlaneseq
        %v1039 = vshrl.u32 %v1038, 7
        %v1040 = vsub.s32 %v623, %v1039
        %v1041 = vrot.slane %v943, %v1040
        %v1042 = vlaneseq
        %v1043 = vshrl.u32 %v1042, 7
        %v1044 = vsub.s32 %v628, %v1043
        %v1045 = vrot.slane %v946, %v1044
        %v1046 = vsel %vm633, %v1045, %v1041
        %v1047 = vlaneseq
        %v1048 = vshrl.u32 %v1047, 7
        %v1049 = vsub.s32 %v635, %v1048
        %v1050 = vrot.slane %v949, %v1049
        %v1051 = vsel %vm640, %v1050, %v1046
        %v1052 = vlaneseq
        %v1053 = vshrl.u32 %v1052, 7
        %v1054 = vsub.s32 %v623, %v1053
        %v1055 = vrot.slane %v952, %v1054
        %v1056 = vlaneseq
        %v1057 = vshrl.u32 %v1056, 7
        %v1058 = vsub.s32 %v628, %v1057
        %v1059 = vrot.slane %v955, %v1058
        %v1060 = vsel %vm633, %v1059, %v1055
        %v1061 = vlaneseq
        %v1062 = vshrl.u32 %v1061, 7
        %v1063 = vsub.s32 %v635, %v1062
        %v1064 = vrot.slane %v958, %v1063
        %v1065 = vsel %vm640, %v1064, %v1060
        %v1066 = vlaneseq
        %v1067 = vshrl.u32 %v1066, 7
        %v1068 = vsub.s32 %v623, %v1067
        %v1069 = vrot.slane %v961, %v1068
        %v1070 = vlaneseq
        %v1071 = vshrl.u32 %v1070, 7
        %v1072 = vsub.s32 %v628, %v1071
        %v1073 = vrot.slane %v964, %v1072
        %v1074 = vsel %vm633, %v1073, %v1069
        %v1075 = vlaneseq
        %v1076 = vshrl.u32 %v1075, 7
        %v1077 = vsub.s32 %v635, %v1076
        %v1078 = vrot.slane %v967, %v1077
        %v1079 = vsel %vm640, %v1078, %v1074
        %v1080 = vsel %vm740, %v995, %v981
        %v1081 = vsel %vm742, %v1009, %v1080
        %v1082 = vsel %vm744, %v1023, %v1081
        %v1083 = vsel %vm746, %v1037, %v1082
        %v1084 = vsel %vm748, %v1051, %v1083
        %v1085 = vsel %vm750, %v1065, %v1084
        %v1086 = vsel %vm752, %v1079, %v1085
        %v1088 = vsel %vm755, %v1086, 0.0
        %1089 = vadd.xlane.f32.xlu0 %v1088
        %v1090 = vpop.xlane.xlu0 %1089
        %v1092 = vlaneseq
        %v1093 = vshrl.u32 %v1092, 7
        %v1094 = vsub.s32 0, %v1093
        %v1095 = vrot.slane %v1090, %v1094
        %v1096 = vlaneseq
        %v1097 = vshrl.u32 %v1096, 7
        %v1098 = vsub.s32 1, %v1097
        %v1099 = vrot.slane %v1090, %v1098
        %v1100 = vlaneseq
        %v1101 = vshrl.u32 %v1100, 7
        %v1102 = vsub.s32 2, %v1101
        %v1103 = vrot.slane %v1090, %v1102
        %v1104 = vlaneseq
        %v1105 = vshrl.u32 %v1104, 7
        %v1106 = vsub.s32 3, %v1105
        %v1107 = vrot.slane %v1090, %v1106
        %v1108 = vlaneseq
        %v1109 = vshrl.u32 %v1108, 7
        %v1110 = vsub.s32 4, %v1109
        %v1111 = vrot.slane %v1090, %v1110
        %v1112 = vlaneseq
        %v1113 = vshrl.u32 %v1112, 7
        %v1114 = vsub.s32 5, %v1113
        %v1115 = vrot.slane %v1090, %v1114
        %v1116 = vlaneseq
        %v1117 = vshrl.u32 %v1116, 7
        %v1118 = vsub.s32 6, %v1117
        %v1119 = vrot.slane %v1090, %v1118
        %v1120 = vlaneseq
        %v1121 = vshrl.u32 %v1120, 7
        %v1122 = vsub.s32 7, %v1121
        %v1123 = vrot.slane %v1090, %v1122
        %v1132 = vrcp.pop %v1095
        %v1133 = vmul.f32 %v825, %v1132
        %v1134 = vmul.f32 %v827, %v1132
        %v1135 = vmul.f32 %v829, %v1132
        %v1136 = vrcp.pop %v1099
        %v1137 = vmul.f32 %v831, %v1136
        %v1138 = vmul.f32 %v833, %v1136
        %v1139 = vmul.f32 %v835, %v1136
        %v1140 = vrcp.pop %v1103
        %v1141 = vmul.f32 %v837, %v1140
        %v1142 = vmul.f32 %v839, %v1140
        %v1143 = vmul.f32 %v841, %v1140
        %v1144 = vrcp.pop %v1107
        %v1145 = vmul.f32 %v843, %v1144
        %v1146 = vmul.f32 %v845, %v1144
        %v1147 = vmul.f32 %v847, %v1144
        %v1148 = vrcp.pop %v1111
        %v1149 = vmul.f32 %v849, %v1148
        %v1150 = vmul.f32 %v851, %v1148
        %v1151 = vmul.f32 %v853, %v1148
        %v1152 = vrcp.pop %v1115
        %v1153 = vmul.f32 %v855, %v1152
        %v1154 = vmul.f32 %v857, %v1152
        %v1155 = vmul.f32 %v859, %v1152
        %v1156 = vrcp.pop %v1119
        %v1157 = vmul.f32 %v861, %v1156
        %v1158 = vmul.f32 %v863, %v1156
        %v1159 = vmul.f32 %v865, %v1156
        %v1160 = vrcp.pop %v1123
        %v1161 = vmul.f32 %v867, %v1160
        %v1162 = vmul.f32 %v869, %v1160
        %v1163 = vmul.f32 %v871, %v1160
        %1165 = vset.pattern.permute.xlu0 0
        %1166 = vperm.xlu0 %1165, %v1133
        %v1167 = vpop.permute.xlu0 %1166
        %1170 = vset.pattern.permute.xlu0 0
        %1171 = vperm.xlu0 %1170, %v1134
        %v1172 = vpop.permute.xlu0 %1171
        %1175 = vset.pattern.permute.xlu0 0
        %1176 = vperm.xlu0 %1175, %v1135
        %v1177 = vpop.permute.xlu0 %1176
        %1180 = vset.pattern.permute.xlu0 0
        %1181 = vperm.xlu0 %1180, %v1137
        %v1182 = vpop.permute.xlu0 %1181
        %1185 = vset.pattern.permute.xlu0 0
        %1186 = vperm.xlu0 %1185, %v1138
        %v1187 = vpop.permute.xlu0 %1186
        %1190 = vset.pattern.permute.xlu0 0
        %1191 = vperm.xlu0 %1190, %v1139
        %v1192 = vpop.permute.xlu0 %1191
        %1195 = vset.pattern.permute.xlu0 0
        %1196 = vperm.xlu0 %1195, %v1141
        %v1197 = vpop.permute.xlu0 %1196
        %1200 = vset.pattern.permute.xlu0 0
        %1201 = vperm.xlu0 %1200, %v1142
        %v1202 = vpop.permute.xlu0 %1201
        %1205 = vset.pattern.permute.xlu0 0
        %1206 = vperm.xlu0 %1205, %v1143
        %v1207 = vpop.permute.xlu0 %1206
        %1210 = vset.pattern.permute.xlu0 0
        %1211 = vperm.xlu0 %1210, %v1145
        %v1212 = vpop.permute.xlu0 %1211
        %1215 = vset.pattern.permute.xlu0 0
        %1216 = vperm.xlu0 %1215, %v1146
        %v1217 = vpop.permute.xlu0 %1216
        %1220 = vset.pattern.permute.xlu0 0
        %1221 = vperm.xlu0 %1220, %v1147
        %v1222 = vpop.permute.xlu0 %1221
        %1225 = vset.pattern.permute.xlu0 0
        %1226 = vperm.xlu0 %1225, %v1149
        %v1227 = vpop.permute.xlu0 %1226
        %1230 = vset.pattern.permute.xlu0 0
        %1231 = vperm.xlu0 %1230, %v1150
        %v1232 = vpop.permute.xlu0 %1231
        %1235 = vset.pattern.permute.xlu0 0
        %1236 = vperm.xlu0 %1235, %v1151
        %v1237 = vpop.permute.xlu0 %1236
        %1240 = vset.pattern.permute.xlu0 0
        %1241 = vperm.xlu0 %1240, %v1153
        %v1242 = vpop.permute.xlu0 %1241
        %1245 = vset.pattern.permute.xlu0 0
        %1246 = vperm.xlu0 %1245, %v1154
        %v1247 = vpop.permute.xlu0 %1246
        %1250 = vset.pattern.permute.xlu0 0
        %1251 = vperm.xlu0 %1250, %v1155
        %v1252 = vpop.permute.xlu0 %1251
        %1255 = vset.pattern.permute.xlu0 0
        %1256 = vperm.xlu0 %1255, %v1157
        %v1257 = vpop.permute.xlu0 %1256
        %1260 = vset.pattern.permute.xlu0 0
        %1261 = vperm.xlu0 %1260, %v1158
        %v1262 = vpop.permute.xlu0 %1261
        %1265 = vset.pattern.permute.xlu0 0
        %1266 = vperm.xlu0 %1265, %v1159
        %v1267 = vpop.permute.xlu0 %1266
        %1270 = vset.pattern.permute.xlu0 0
        %1271 = vperm.xlu0 %1270, %v1161
        %v1272 = vpop.permute.xlu0 %1271
        %1275 = vset.pattern.permute.xlu0 0
        %1276 = vperm.xlu0 %1275, %v1162
        %v1277 = vpop.permute.xlu0 %1276
        %1280 = vset.pattern.permute.xlu0 0
        %1281 = vperm.xlu0 %1280, %v1163
        %v1282 = vpop.permute.xlu0 %1281
        %v1284 = vmul.f32 %v228, %v1167
        %v1285 = vmul.f32 %v229, %v1172
        %v1286 = vmul.f32 %v230, %v1177
        %v1287 = vmul.f32 %v231, %v1182
        %v1288 = vmul.f32 %v232, %v1187
        %v1289 = vmul.f32 %v233, %v1192
        %v1290 = vmul.f32 %v234, %v1197
        %v1291 = vmul.f32 %v235, %v1202
        %v1292 = vmul.f32 %v236, %v1207
        %v1293 = vmul.f32 %v237, %v1212
        %v1294 = vmul.f32 %v238, %v1217
        %v1295 = vmul.f32 %v239, %v1222
        %v1296 = vmul.f32 %v240, %v1227
        %v1297 = vmul.f32 %v241, %v1232
        %v1298 = vmul.f32 %v242, %v1237
        %v1299 = vmul.f32 %v243, %v1242
        %v1300 = vmul.f32 %v244, %v1247
        %v1301 = vmul.f32 %v245, %v1252
        %v1302 = vmul.f32 %v246, %v1257
        %v1303 = vmul.f32 %v247, %v1262
        %v1304 = vmul.f32 %v248, %v1267
        %v1305 = vmul.f32 %v249, %v1272
        %v1306 = vmul.f32 %v250, %v1277
        %v1307 = vmul.f32 %v251, %v1282
        %v1308 = vsel %vm283, %v1284, 0.0
        %v1309 = vsel %vm283, %v1285, 0.0
        %v1310 = vadd.f32 %v1308, %v1309
        %v1311 = vsel %vm283, %v1286, 0.0
        %v1312 = vadd.f32 %v1310, %v1311
        %v1313 = vrot.slane %v1312, 4
        %v1314 = vadd.f32 %v1312, %v1313
        %v1315 = vrot.slane %v1314, 2
        %v1316 = vadd.f32 %v1314, %v1315
        %v1317 = vrot.slane %v1316, 1
        %v1318 = vadd.f32 %v1316, %v1317
        %v1319 = vsel %vm283, %v1287, 0.0
        %v1320 = vsel %vm283, %v1288, 0.0
        %v1321 = vadd.f32 %v1319, %v1320
        %v1322 = vsel %vm283, %v1289, 0.0
        %v1323 = vadd.f32 %v1321, %v1322
        %v1324 = vrot.slane %v1323, 4
        %v1325 = vadd.f32 %v1323, %v1324
        %v1326 = vrot.slane %v1325, 2
        %v1327 = vadd.f32 %v1325, %v1326
        %v1328 = vrot.slane %v1327, 1
        %v1329 = vadd.f32 %v1327, %v1328
        %v1330 = vsel %vm283, %v1290, 0.0
        %v1331 = vsel %vm283, %v1291, 0.0
        %v1332 = vadd.f32 %v1330, %v1331
        %v1333 = vsel %vm283, %v1292, 0.0
        %v1334 = vadd.f32 %v1332, %v1333
        %v1335 = vrot.slane %v1334, 4
        %v1336 = vadd.f32 %v1334, %v1335
        %v1337 = vrot.slane %v1336, 2
        %v1338 = vadd.f32 %v1336, %v1337
        %v1339 = vrot.slane %v1338, 1
        %v1340 = vadd.f32 %v1338, %v1339
        %v1341 = vsel %vm283, %v1293, 0.0
        %v1342 = vsel %vm283, %v1294, 0.0
        %v1343 = vadd.f32 %v1341, %v1342
        %v1344 = vsel %vm283, %v1295, 0.0
        %v1345 = vadd.f32 %v1343, %v1344
        %v1346 = vrot.slane %v1345, 4
        %v1347 = vadd.f32 %v1345, %v1346
        %v1348 = vrot.slane %v1347, 2
        %v1349 = vadd.f32 %v1347, %v1348
        %v1350 = vrot.slane %v1349, 1
        %v1351 = vadd.f32 %v1349, %v1350
        %v1352 = vsel %vm283, %v1296, 0.0
        %v1353 = vsel %vm283, %v1297, 0.0
        %v1354 = vadd.f32 %v1352, %v1353
        %v1355 = vsel %vm283, %v1298, 0.0
        %v1356 = vadd.f32 %v1354, %v1355
        %v1357 = vrot.slane %v1356, 4
        %v1358 = vadd.f32 %v1356, %v1357
        %v1359 = vrot.slane %v1358, 2
        %v1360 = vadd.f32 %v1358, %v1359
        %v1361 = vrot.slane %v1360, 1
        %v1362 = vadd.f32 %v1360, %v1361
        %v1363 = vsel %vm283, %v1299, 0.0
        %v1364 = vsel %vm283, %v1300, 0.0
        %v1365 = vadd.f32 %v1363, %v1364
        %v1366 = vsel %vm283, %v1301, 0.0
        %v1367 = vadd.f32 %v1365, %v1366
        %v1368 = vrot.slane %v1367, 4
        %v1369 = vadd.f32 %v1367, %v1368
        %v1370 = vrot.slane %v1369, 2
        %v1371 = vadd.f32 %v1369, %v1370
        %v1372 = vrot.slane %v1371, 1
        %v1373 = vadd.f32 %v1371, %v1372
        %v1374 = vsel %vm283, %v1302, 0.0
        %v1375 = vsel %vm283, %v1303, 0.0
        %v1376 = vadd.f32 %v1374, %v1375
        %v1377 = vsel %vm283, %v1304, 0.0
        %v1378 = vadd.f32 %v1376, %v1377
        %v1379 = vrot.slane %v1378, 4
        %v1380 = vadd.f32 %v1378, %v1379
        %v1381 = vrot.slane %v1380, 2
        %v1382 = vadd.f32 %v1380, %v1381
        %v1383 = vrot.slane %v1382, 1
        %v1384 = vadd.f32 %v1382, %v1383
        %v1385 = vsel %vm283, %v1305, 0.0
        %v1386 = vsel %vm283, %v1306, 0.0
        %v1387 = vadd.f32 %v1385, %v1386
        %v1388 = vsel %vm283, %v1307, 0.0
        %v1389 = vadd.f32 %v1387, %v1388
        %v1390 = vrot.slane %v1389, 4
        %v1391 = vadd.f32 %v1389, %v1390
        %v1392 = vrot.slane %v1391, 2
        %v1393 = vadd.f32 %v1391, %v1392
        %v1394 = vrot.slane %v1393, 1
        %v1395 = vadd.f32 %v1393, %v1394
        %v1404 = vsel %vm740, %v1329, %v1318
        %v1405 = vsel %vm742, %v1340, %v1404
        %v1406 = vsel %vm744, %v1351, %v1405
        %v1407 = vsel %vm746, %v1362, %v1406
        %v1408 = vsel %vm748, %v1373, %v1407
        %v1409 = vsel %vm750, %v1384, %v1408
        %v1410 = vsel %vm752, %v1395, %v1409
        %1412 = vst.msk [vmem:[%s226] sm:$0xff] %vm283, %v1410
        %s1413 = sand.u32 %s104, 1
        %s1414 = scalar_lea.sflag [#allocation4], %s1413
        %s1415 = sand.u32 %s104, 1
        %s1416 = smul.addr %s1415, 8
        %s1417 = scalar_lea.vmem [#allocation7], %s1416
        // Predicated region
        $region41: #{self_attention_pooling.1} parent=31 // pred_check
          %p1418 = pneg %p114
        $region42: #{self_attention_pooling.1} parent=31 // pred_check_branch
          %1420 = sbr.rel (%p1418) target = $region44
        $region43: #{self_attention_pooling.1} parent=31 // pred_region
          %s1422 = ssub.s32 128, 128
          %1423 = vsyncadd %s1414, %s1422
          %s1424 = smul.addr %s23, 128
          %s1425 = scalar_lea.hbm %s3, %s1424
          %s1427 = sshll.u32 %s1417, 4
          %s1428 = int_to_ptr.vmem [resolvable:$true] %s1427
          %1430 = dma.vmem_to_hbm [thread:$0]  %s1428, 128, %s1425, %s1414
        $region44: #{self_attention_pooling.1} parent=31 // pred_fallthru
          _
      $region32: #{self_attention_pooling.1} parent=5 // pred_fallthru
        _
      %p1431 = scmp.le.s32.totalorder 2, %s18
      // Predicated region
      $region45: #{self_attention_pooling.1} parent=5 // pred_check
        %p1432 = pneg %p1431
      $region46: #{self_attention_pooling.1} parent=5 // pred_check_branch
        %1434 = sbr.rel (%p1432) target = $region48
      $region47: #{self_attention_pooling.1} parent=5 // pred_region
        %s1435 = ssub.s32 %s18, 2
        // Predicated region
        $region49: #{self_attention_pooling.1} parent=47 // pred_check
          %p1436 = pneg %p120
        $region50: #{self_attention_pooling.1} parent=47 // pred_check_branch
          %1438 = sbr.rel (%p1436) target = $region52
        $region51: #{self_attention_pooling.1} parent=47 // pred_region
          %s1439 = sand.u32 %s105, 1
          %s1440 = scalar_lea.sflag [#allocation4], %s1439
          %s1441 = sand.u32 %s105, 1
          %s1442 = smul.addr %s1441, 8
          %s1443 = scalar_lea.vmem [#allocation7], %s1442
          %1444 = dma.done %s1440, 128
        $region52: #{self_attention_pooling.1} parent=47 // pred_fallthru
          _
      $region48: #{self_attention_pooling.1} parent=5 // pred_fallthru
        _
    $region6: #{self_attention_pooling.1} parent=1 // loop_footer
      %s22 = sadd.s32 1, %s18
    $region7: #{self_attention_pooling.1} parent=1 // loop_footer_branch
      %17 = sbr.rel target = $region3
    $region8: #{self_attention_pooling.1} parent=1 // loop_exit
      _
    %1445 = vsyncpa [#allocation3], 1
    %s1446 = scalar_lea.sflag [#allocation3], 1
    %1447 = vsyncpa %s1446, 1
    %1448 = vsyncpa [#allocation6], 1
    %s1449 = scalar_lea.sflag [#allocation6], 1
    %1450 = vsyncpa %s1449, 1
    %1451 = vsyncpa [#allocation4], 1
    %s1452 = scalar_lea.sflag [#allocation4], 1
    %1453 = vsyncpa %s1452, 1

</llo_original>
